<compile_context>
chip_gen: v5e
topology: v5e:2x2
jax: 0.10.0
libtpu: 0.0.40
codegen_flags: <defaults>
</compile_context>

<pallas_src>
import functools
import math

import jax
import jax.numpy as jnp
from jax.experimental import pallas as pl
from jax.experimental.pallas import tpu as pltpu


_BOUND = 127.0                        # 2^(8-1) - 1, signed narrow-range int8
_MAX_BLOCK_BYTES = 4 * 1024 * 1024    # per-block cap: 3 arrays x 2 bufs x 4 MiB
                                      # = 24 MiB <= 32 MiB scoped VMEM everywhere
_MIN_MAIN_BLOCK_BYTES = 256 * 1024    # on big tensors, smaller blocks => per-step
                                      # overhead dominates -> take the fallback
_BIG_TENSOR_BYTES = 16 * 1024 * 1024
_VMEM_LIMIT = 32 * 1024 * 1024
_FALLBACK_LANES = 128


def _fake_quant(t, scale, inv_scale):
    """pytorch-quantization fake_tensor_quant (8-bit signed, narrow range).

    Math always runs in f32 (bf16 inputs are upcast) to match the fp32
    PyTorch reference; clip is one max + one min on the VPU.
    """
    t32 = t.astype(jnp.float32)
    return jnp.clip(jnp.round(t32 * inv_scale), -_BOUND, _BOUND) * scale


# ----------------------------------------------------------------------------
# Fast path: lane-dense flattened layout, sublane-aligned tiles, unmasked stores
# ----------------------------------------------------------------------------
def _tiled_kernel(tiles_x, scale_ref, x_ref, y_ref, o_ref):
    # scale_ref: (2,) f32 in SMEM (scalar prefetch): [scale, inv_scale]
    scale = scale_ref[0]
    inv_scale = scale_ref[1]
    t = pl.program_id(1)

    @pl.when(t < tiles_x)
    def _():
        o_ref[...] = _fake_quant(x_ref[...], scale, inv_scale).astype(o_ref.dtype)

    @pl.when(t >= tiles_x)
    def _():
        o_ref[...] = _fake_quant(y_ref[...], scale, inv_scale).astype(o_ref.dtype)


def _divisors(n):
    ds = set()
    i = 1
    while i * i <= n:
        if n % i == 0:
            ds.add(i)
            ds.add(n // i)
        i += 1
    return sorted(ds)


def _select_tiling(Lx, Ly, itemsize, max_block_bytes):
    """Pick (block_elems, lanes, tile_rows) maximizing block size subject to:
       lanes in {2048,...,128} dividing gcd(Lx, Ly); tile_rows a multiple of 8
       dividing both row counts; block bytes <= cap. Returns None if impossible.
    """
    g = math.gcd(Lx, Ly)
    best = None
    for lanes in (2048, 1024, 512, 256, 128):
        if g % lanes:
            continue
        rows_g = g // lanes                      # == gcd(Lx//lanes, Ly//lanes)
        cap_rows = max(1, max_block_bytes // (lanes * itemsize))
        tr = None
        for d in sorted(_divisors(rows_g), reverse=True):
            if d % 8 == 0 and d <= cap_rows:
                tr = d
                break
        if tr is None:
            continue
        blk = tr * lanes
        if best is None or blk > best[0] or (blk == best[0] and lanes > best[1]):
            best = (blk, lanes, tr)
    return best


# ----------------------------------------------------------------------------
# Fallback path (exotic shapes): tiled, lane-dense, padded elementwise quant
# ----------------------------------------------------------------------------
def _elementwise_kernel(scale_ref, x_ref, o_ref):
    o_ref[...] = _fake_quant(x_ref[...], scale_ref[0], scale_ref[1]).astype(o_ref.dtype)


def _fallback_fake_quant(t, scales):
    """Fake-quant any tensor via a tiled (tr, 128) grid; pads the flattened
    tensor to a sublane/lane-aligned shape (extra HBM copy, fallback only)."""
    orig_shape = t.shape
    flat = t.reshape(-1)
    n = flat.shape[0]
    rows_needed = -(-n // _FALLBACK_LANES)
    tr = min(2048, max(8, -(-rows_needed // 8) * 8))       # <= 1 MiB f32 blocks
    rows = -(-rows_needed // tr) * tr
    padded = rows * _FALLBACK_LANES
    if padded != n:
        flat = jnp.pad(flat, (0, padded - n))
    t2 = flat.reshape(rows, _FALLBACK_LANES)

    out = pl.pallas_call(
        _elementwise_kernel,
        out_shape=jax.ShapeDtypeStruct((rows, _FALLBACK_LANES), t.dtype),
        grid_spec=pltpu.PrefetchScalarGridSpec(
            num_scalar_prefetch=1,
            grid=(rows // tr,),
            in_specs=[pl.BlockSpec((tr, _FALLBACK_LANES), lambda i, s: (i, 0))],
            out_specs=pl.BlockSpec((tr, _FALLBACK_LANES), lambda i, s: (i, 0)),
        ),
        compiler_params=pltpu.CompilerParams(
            dimension_semantics=("parallel",),
            vmem_limit_bytes=_VMEM_LIMIT),
    )(scales, t2)
    return out.reshape(-1)[:n].reshape(orig_shape)


def _quant_concat_fallback(x, y, scales):
    # TODO(synk): fallback pays extra pad + concat HBM copies; only used when
    # the flattened per-image sizes share no 1024-element-aligned divisor.
    qx = _fallback_fake_quant(x, scales)
    qy = _fallback_fake_quant(y, scales)
    return jnp.concatenate([qx, qy], axis=1)


# ----------------------------------------------------------------------------
# Public wrapper
# ----------------------------------------------------------------------------
def quant_concat(x, y, amax):
    """x: (N, C1, H, W), y: (N, C2, H, W) float32/bf16 NCHW; amax: scalar."""
    N, C1, H, W = x.shape
    Ny, C2, Hy, Wy = y.shape
    assert (Ny, Hy, Wy) == (N, H, W)
    assert x.dtype == y.dtype
    HW = H * W
    Lx, Ly = C1 * HW, C2 * HW
    dtype = x.dtype
    itemsize = jnp.dtype(dtype).itemsize

    # Guard amax == 0 (TensorQuantizer guards zero amax too) and precompute
    # quant/dequant scales once; deliver both via scalar prefetch (SMEM).
    amax = jnp.maximum(jnp.asarray(amax, jnp.float32).reshape(()),
                       jnp.finfo(jnp.float32).tiny)
    inv_scale = jnp.float32(_BOUND) / amax
    scale = amax / jnp.float32(_BOUND)
    scales = jnp.stack([scale, inv_scale])  # (2,) f32

    sel = _select_tiling(Lx, Ly, itemsize, _MAX_BLOCK_BYTES)
    big = (Lx + Ly) * itemsize > _BIG_TENSOR_BYTES
    if sel is None or (big and sel[0] * itemsize < _MIN_MAIN_BLOCK_BYTES):
        return _quant_concat_fallback(x, y, scales)

    _, lanes, tile_rows = sel
    rows_x, rows_y = Lx // lanes, Ly // lanes

    # v7x megacore: prefer >= 4 total grid steps so both TensorCores stay busy;
    # shrink tile_rows (keeping 8-alignment + divisibility) if possible.
    def _total_steps(tr):
        return N * ((rows_x + rows_y) // tr)
    if _total_steps(tile_rows) < 4:
        for d in sorted(_divisors(math.gcd(rows_x, rows_y)), reverse=True):
            if d % 8 == 0 and d < tile_rows and _total_steps(d) >= 4:
                tile_rows = d
                break

    tiles_x, tiles_y = rows_x // tile_rows, rows_y // tile_rows

    x3 = x.reshape(N, rows_x, lanes)   # contiguous NCHW -> free view
    y3 = y.reshape(N, rows_y, lanes)

    kernel = functools.partial(_tiled_kernel, tiles_x)

    total_elems = N * (Lx + Ly)
    cost = pl.CostEstimate(
        flops=5 * total_elems,
        transcendentals=0,
        bytes_accessed=2 * itemsize * total_elems,   # read x+y, write out
    )

    out = pl.pallas_call(
        kernel,
        out_shape=jax.ShapeDtypeStruct((N, rows_x + rows_y, lanes), dtype),
        grid_spec=pltpu.PrefetchScalarGridSpec(
            num_scalar_prefetch=1,
            grid=(N, tiles_x + tiles_y),
            in_specs=[
                # Clamped maps: the momentarily-unused side re-fetches its last
                # block (deduped for consecutive steps) -- documented VMEM cost.
                pl.BlockSpec((1, tile_rows, lanes),
                             lambda n, t, s: (n, jnp.minimum(t, tiles_x - 1), 0)),
                pl.BlockSpec((1, tile_rows, lanes),
                             lambda n, t, s: (n, jnp.maximum(t - tiles_x, 0), 0)),
            ],
            out_specs=pl.BlockSpec((1, tile_rows, lanes),
                                   lambda n, t, s: (n, t, 0)),
        ),
        compiler_params=pltpu.CompilerParams(
            dimension_semantics=("parallel", "parallel"),
            vmem_limit_bytes=_VMEM_LIMIT),
        cost_estimate=cost,
    )(scales, x3, y3)

    return out.reshape(N, C1 + C2, H, W)


if __name__ == "__main__":
    key = jax.random.PRNGKey(0)
    kx, ky = jax.random.split(key)

    # Small shapes consistent with an NCHW conv feature map.
    x = jax.random.normal(kx, (2, 4, 16, 16), dtype=jnp.float32)
    y = jax.random.normal(ky, (2, 4, 16, 16), dtype=jnp.float32)

    # Deterministic "calibration": per-tensor max-abs amax over both inputs.
    # TODO(synk): the module's histogram calibrator has no clean Pallas
    # equivalent; deterministic max-abs calibration is used instead.
    amax = jnp.maximum(jnp.max(jnp.abs(x)), jnp.max(jnp.abs(y)))

    out = jax.block_until_ready(quant_concat(x, y, amax))

    # Pure-JAX reference using the exact same scale formulation as the kernel.
    amax_g = jnp.maximum(amax.astype(jnp.float32), jnp.finfo(jnp.float32).tiny)
    ref_inv_scale = jnp.float32(_BOUND) / amax_g
    ref_scale = amax_g / jnp.float32(_BOUND)
    ref = jnp.concatenate(
        [_fake_quant(x, ref_scale, ref_inv_scale),
         _fake_quant(y, ref_scale, ref_inv_scale)], axis=1).astype(x.dtype)

    assert out.shape == (2, 8, 16, 16)
    assert out.dtype == x.dtype
    assert jnp.allclose(out, ref, atol=1e-6), "mismatch vs reference"

    print("KERNEL_OK")
</pallas_src>

<mosaic_0001>
module attributes {stable_mosaic.version = 11 : i64} {
  func.func @_tiled_kernel(%arg0: i32, %arg1: i32, %arg2: memref<2xf32, #tpu.memory_space<smem>>, %arg3: memref<1x8x128xf32, #tpu.memory_space<vmem>>, %arg4: memref<1x8x128xf32, #tpu.memory_space<vmem>>, %arg5: memref<1x8x128xf32, #tpu.memory_space<vmem>>) attributes {dimension_semantics = [#tpu.dimension_semantics<parallel>, #tpu.dimension_semantics<parallel>], iteration_bounds = array<i64: 2, 2>, scalar_prefetch = 1 : i64, scratch_operands = 0 : i64, tpu.core_type = #tpu.core_type<tc>, window_params = [{transform_indices = @transform_0, window_bounds = array<i64: 1, 8, 128>}, {transform_indices = @transform_1, window_bounds = array<i64: 1, 8, 128>}, {transform_indices = @transform_2, window_bounds = array<i64: 1, 8, 128>}]} {
    %c0 = arith.constant 0 : index
    %0 = memref.load %arg2[%c0] : memref<2xf32, #tpu.memory_space<smem>>
    %c1 = arith.constant 1 : index
    %1 = memref.load %arg2[%c1] : memref<2xf32, #tpu.memory_space<smem>>
    %c1_i32 = arith.constant 1 : i32
    %2 = arith.cmpi slt, %arg1, %c1_i32 : i32
    %3 = arith.extui %2 : i1 to i32
    %c0_i32 = arith.constant 0 : i32
    %4 = arith.cmpi ne, %3, %c0_i32 : i32
    scf.if %4 {
      %c0_2 = arith.constant 0 : index
      %c0_3 = arith.constant 0 : index
      %c0_4 = arith.constant 0 : index
      %8 = vector.load %arg3[%c0_2, %c0_3, %c0_4] : memref<1x8x128xf32, #tpu.memory_space<vmem>>, vector<1x8x128xf32>
      %9 = vector.broadcast %1 : f32 to vector<1x8x128xf32>
      %10 = arith.mulf %8, %9 : vector<1x8x128xf32>
      %11 = math.roundeven %10 : vector<1x8x128xf32>
      %cst = arith.constant -1.270000e+02 : f32
      %cst_5 = arith.constant 1.270000e+02 : f32
      %12 = vector.broadcast %cst : f32 to vector<1x8x128xf32>
      %13 = arith.maximumf %12, %11 : vector<1x8x128xf32>
      %14 = vector.broadcast %cst_5 : f32 to vector<1x8x128xf32>
      %15 = arith.minimumf %14, %13 : vector<1x8x128xf32>
      %16 = vector.broadcast %0 : f32 to vector<1x8x128xf32>
      %17 = arith.mulf %15, %16 : vector<1x8x128xf32>
      %c0_6 = arith.constant 0 : index
      %c0_7 = arith.constant 0 : index
      %c0_8 = arith.constant 0 : index
      %18 = vector.load %arg5[%c0_6, %c0_7, %c0_8] : memref<1x8x128xf32, #tpu.memory_space<vmem>>, vector<1x8x128xf32>
      tpu.vector_store %arg5[%c0_6, %c0_7, %c0_8], %17 {strides = array<i32>} : memref<1x8x128xf32, #tpu.memory_space<vmem>>, vector<1x8x128xf32>,
    } else {
    }
    %c1_i32_0 = arith.constant 1 : i32
    %5 = arith.cmpi sge, %arg1, %c1_i32_0 : i32
    %6 = arith.extui %5 : i1 to i32
    %c0_i32_1 = arith.constant 0 : i32
    %7 = arith.cmpi ne, %6, %c0_i32_1 : i32
    scf.if %7 {
      %c0_2 = arith.constant 0 : index
      %c0_3 = arith.constant 0 : index
      %c0_4 = arith.constant 0 : index
      %8 = vector.load %arg4[%c0_2, %c0_3, %c0_4] : memref<1x8x128xf32, #tpu.memory_space<vmem>>, vector<1x8x128xf32>
      %9 = vector.broadcast %1 : f32 to vector<1x8x128xf32>
      %10 = arith.mulf %8, %9 : vector<1x8x128xf32>
      %11 = math.roundeven %10 : vector<1x8x128xf32>
      %cst = arith.constant -1.270000e+02 : f32
      %cst_5 = arith.constant 1.270000e+02 : f32
      %12 = vector.broadcast %cst : f32 to vector<1x8x128xf32>
      %13 = arith.maximumf %12, %11 : vector<1x8x128xf32>
      %14 = vector.broadcast %cst_5 : f32 to vector<1x8x128xf32>
      %15 = arith.minimumf %14, %13 : vector<1x8x128xf32>
      %16 = vector.broadcast %0 : f32 to vector<1x8x128xf32>
      %17 = arith.mulf %15, %16 : vector<1x8x128xf32>
      %c0_6 = arith.constant 0 : index
      %c0_7 = arith.constant 0 : index
      %c0_8 = arith.constant 0 : index
      %18 = vector.load %arg5[%c0_6, %c0_7, %c0_8] : memref<1x8x128xf32, #tpu.memory_space<vmem>>, vector<1x8x128xf32>
      tpu.vector_store %arg5[%c0_6, %c0_7, %c0_8], %17 {strides = array<i32>} : memref<1x8x128xf32, #tpu.memory_space<vmem>>, vector<1x8x128xf32>,
    } else {
    }
    return
  }
  func.func @transform_0(%arg0: i32, %arg1: i32, %arg2: memref<2xf32, #tpu.memory_space<smem>>) -> (i32, i32, i32) {
    %c0_i32 = arith.constant 0 : i32
    %0 = arith.minsi %arg1, %c0_i32 : i32
    %c0_i32_0 = arith.constant 0 : i32
    %c0_i32_1 = arith.constant 0 : i32
    return %arg0, %0, %c0_i32_0 : i32, i32, i32
  }
  func.func @transform_1(%arg0: i32, %arg1: i32, %arg2: memref<2xf32, #tpu.memory_space<smem>>) -> (i32, i32, i32) {
    %c1_i32 = arith.constant 1 : i32
    %0 = arith.subi %arg1, %c1_i32 : i32
    %c0_i32 = arith.constant 0 : i32
    %1 = arith.maxsi %0, %c0_i32 : i32
    %c0_i32_0 = arith.constant 0 : i32
    %c0_i32_1 = arith.constant 0 : i32
    return %arg0, %1, %c0_i32_0 : i32, i32, i32
  }
  func.func @transform_2(%arg0: i32, %arg1: i32, %arg2: memref<2xf32, #tpu.memory_space<smem>>) -> (i32, i32, i32) {
    %c0_i32 = arith.constant 0 : i32
    %c0_i32_0 = arith.constant 0 : i32
    return %arg0, %arg1, %c0_i32 : i32, i32, i32
  }
}

</mosaic_0001>

<llo_original>
// kernel: tpu_custom_call.1
$region0: #{tpu_custom_call.1}
  #allocation0 [shape = 'u32[]', space=smem, size = 0x4, offset = 0x4, fixed_abs, tag = 'smem constant byte address 0x4 - core index']
  #allocation1 [shape = 'u32[72,128]{1,0:T(1,128)}', space=vmem, size = 0x9000, scoped, tag = 'internal scratch']
  #allocation2 [shape = 's32[1]{0}', space=sflag, size = 0x4, scoped, tag = 'scoped memory for tpu_custom_call.1']
  #allocation3 [shape = 'u8[512]{0}', space=smem, size = 0x200, scoped, tag = 'prefetched SMEM operand 0']
  %s0 = inlined_call_operand.hbm [shape: f32[2], index: 0, kind: input, shape index: {}]
  %s1 = inlined_call_operand.hbm [shape: f32[2,8,128], index: 1, kind: input, shape index: {}]
  %s2 = inlined_call_operand.hbm [shape: f32[2,8,128], index: 2, kind: input, shape index: {}]
  %s3 = inlined_call_operand.hbm [shape: f32[2,16,128], index: 3, kind: output, shape index: {}]
  %s4 = sld [smem:[#allocation0]]
  $region57: #{tpu_custom_call.1} parent=0
    _
  %s6 = ssub.s32 1, %s4
  %s7 = scalar_select 0, %s6, %s4
  %s9 = sshll.u32 %s0, 4
  %s10 = int_to_ptr.hbm [resolvable:$true] %s9
  %12 = dma.hbm_to_smem %s10, 16, [#allocation3], [#allocation2]
  %14 = dma.done [#allocation2], 16
  %15 = sfence
  $region1: #{tpu_custom_call.1} parent=0
    #allocation4 [shape = 'u8[8192]{0}', space=vmem, size = 0x2000, scoped, tag = 'input window, operand 1']
    #allocation5 [shape = 's32[2]{0}', space=sflag, size = 0x8, scoped, tag = 'scoped memory for tpu_custom_call.1']
    #allocation6 [shape = 's32[2]{0}', space=sflag, size = 0x8, scoped, tag = 'scoped memory for tpu_custom_call.1']
    #allocation7 [shape = 'u8[8192]{0}', space=vmem, size = 0x2000, scoped, tag = 'input window, operand 2']
    #allocation8 [shape = 's32[2]{0}', space=sflag, size = 0x8, scoped, tag = 'scoped memory for tpu_custom_call.1']
    #allocation9 [shape = 'u8[8192]{0}', space=vmem, size = 0x2000, scoped, tag = 'output window, operand 0']
    %16 = vsyncpa [#allocation5], 0
    %s17 = scalar_lea.sflag [#allocation5], 1
    %18 = vsyncpa %s17, 0
    %19 = vsyncpa [#allocation8], 0
    %s20 = scalar_lea.sflag [#allocation8], 1
    %21 = vsyncpa %s20, 0
    %22 = vsyncpa [#allocation6], 0
    %s23 = scalar_lea.sflag [#allocation6], 1
    %24 = vsyncpa %s23, 0
    loop: start=0, step=1, limit=6
    $region2: #{tpu_custom_call.1} parent=1 // loop_pre_header
      _
    $region3: #{tpu_custom_call.1} parent=1 // loop_header
      %s26 = sphi 0, %s30
      %p27 = scmp.ge.s32.totalorder %s26, 6
      %s33 = sphi 0, %s45
      %s34 = sphi 0, %s41
      %s35 = sphi 0, %s33
      %s36 = sphi 0, %s34
      %s37 = sphi 0, %s35
      %s38 = sphi 0, %s36
      %s54 = sphi 0, %s56
      %s57 = sphi 0, %s54
      %s58 = sphi 0, %s57
      %s74 = sphi 0, %s58
      %s88 = sphi 0, %s90
      %s91 = sphi 0, %s88
      %s92 = sphi 0, %s91
      %s108 = sphi 0, %s92
      %s116 = sphi 0, %s118
      %s119 = sphi 0, %s116
      %s120 = sphi 0, %s119
      %s136 = sphi 0, %s120
    $region4: #{tpu_custom_call.1} parent=1 // loop_header_branch
      %29 = sbr.rel (%p27) target = $region8
    $region5: #{tpu_custom_call.1} parent=1 // loop_body
      %s31 = ssub.s32 %s26, 1
      %s32 = ssub.s32 %s26, 2
      %s39 = sadd.s32 1, %s34
      %p40 = scmp.ge.s32.totalorder %s39, 2
      %s41 = scalar_select %p40, 0, %s39
      %s42 = sadd.s32 1, %s33
      %s43 = scalar_select %p40, %s42, %s33
      %p44 = scmp.ge.s32.totalorder %s43, 2
      %s45 = scalar_select %p44, 0, %s43
      %p46 = scmp.lt.s32.totalorder %s34, 0
      %s47 = scalar_select %p46, %s34, 0
      %p48 = scmp.lt.s32.totalorder %s41, 0
      %s49 = scalar_select %p48, %s41, 0
      %s50 = ssub.s32 %s33, %s45
      %s51 = ssub.s32 %s47, %s49
      %s52 = sor.u32 %s50, %s51
      %p53 = scmp.eq.s32.totalorder %s52, 0
      %s55 = sadd.s32 %s54, 1
      %s56 = scalar_select %p53, %s54, %s55
      %p59 = pneg %p53
      %p60 = scmp.eq.s32.totalorder %s26, 3
      %p61 = por %p59, %p60
      %p62 = scmp.ne.s32.totalorder %s54, %s57
      %p63 = scmp.eq.s32.totalorder %s26, 0
      %p64 = por %p62, %p63
      %p65 = scmp.ne.s32.totalorder %s54, %s57
      %p66 = scmp.eq.s32.totalorder %s31, 3
      %p67 = por %p65, %p66
      %p68 = scmp.ne.s32.totalorder %s57, %s58
      %p69 = scmp.eq.s32.totalorder %s31, 0
      %p70 = por %p68, %p69
      %p71 = scmp.ne.s32.totalorder %s57, %s58
      %p72 = scmp.eq.s32.totalorder %s32, 3
      %p73 = por %p71, %p72
      %p75 = scmp.ne.s32.totalorder %s58, %s74
      %p76 = scmp.eq.s32.totalorder %s32, 0
      %p77 = por %p75, %p76
      %s78 = ssub.s32 %s34, 1
      %p79 = scmp.gt.s32.totalorder %s78, 0
      %s80 = scalar_select %p79, %s78, 0
      %s81 = ssub.s32 %s41, 1
      %p82 = scmp.gt.s32.totalorder %s81, 0
      %s83 = scalar_select %p82, %s81, 0
      %s84 = ssub.s32 %s33, %s45
      %s85 = ssub.s32 %s80, %s83
      %s86 = sor.u32 %s84, %s85
      %p87 = scmp.eq.s32.totalorder %s86, 0
      %s89 = sadd.s32 %s88, 1
      %s90 = scalar_select %p87, %s88, %s89
      %p93 = pneg %p87
      %p94 = scmp.eq.s32.totalorder %s26, 3
      %p95 = por %p93, %p94
      %p96 = scmp.ne.s32.totalorder %s88, %s91
      %p97 = scmp.eq.s32.totalorder %s26, 0
      %p98 = por %p96, %p97
      %p99 = scmp.ne.s32.totalorder %s88, %s91
      %p100 = scmp.eq.s32.totalorder %s31, 3
      %p101 = por %p99, %p100
      %p102 = scmp.ne.s32.totalorder %s91, %s92
      %p103 = scmp.eq.s32.totalorder %s31, 0
      %p104 = por %p102, %p103
      %p105 = scmp.ne.s32.totalorder %s91, %s92
      %p106 = scmp.eq.s32.totalorder %s32, 3
      %p107 = por %p105, %p106
      %p109 = scmp.ne.s32.totalorder %s92, %s108
      %p110 = scmp.eq.s32.totalorder %s32, 0
      %p111 = por %p109, %p110
      %s112 = ssub.s32 %s33, %s45
      %s113 = ssub.s32 %s34, %s41
      %s114 = sor.u32 %s112, %s113
      %p115 = scmp.eq.s32.totalorder %s114, 0
      %s117 = sadd.s32 %s116, 1
      %s118 = scalar_select %p115, %s116, %s117
      %p121 = pneg %p115
      %p122 = scmp.eq.s32.totalorder %s26, 3
      %p123 = por %p121, %p122
      %p124 = scmp.ne.s32.totalorder %s116, %s119
      %p125 = scmp.eq.s32.totalorder %s26, 0
      %p126 = por %p124, %p125
      %p127 = scmp.ne.s32.totalorder %s116, %s119
      %p128 = scmp.eq.s32.totalorder %s31, 3
      %p129 = por %p127, %p128
      %p130 = scmp.ne.s32.totalorder %s119, %s120
      %p131 = scmp.eq.s32.totalorder %s31, 0
      %p132 = por %p130, %p131
      %p133 = scmp.ne.s32.totalorder %s119, %s120
      %p134 = scmp.eq.s32.totalorder %s32, 3
      %p135 = por %p133, %p134
      %p137 = scmp.ne.s32.totalorder %s120, %s136
      %p138 = scmp.eq.s32.totalorder %s32, 0
      %p139 = por %p137, %p138
      %p140 = scmp.le.s32.totalorder 1, %s26
      %p141 = scmp.lt.s32.totalorder %s26, 5
      %p142 = pnand %p140, %p141
      %p143 = pneg %p142
      // Predicated region
      $region9: #{tpu_custom_call.1} parent=5 // pred_check
        _
      $region10: #{tpu_custom_call.1} parent=5 // pred_check_branch
        %145 = sbr.rel (%p142) target = $region12
      $region11: #{tpu_custom_call.1} parent=5 // pred_region
        %s146 = ssub.s32 %s26, 1
      $region12: #{tpu_custom_call.1} parent=5 // pred_fallthru
        _
      %p147 = scmp.lt.s32.totalorder %s26, 4
      // Predicated region
      $region13: #{tpu_custom_call.1} parent=5 // pred_check
        %p148 = pneg %p147
      $region14: #{tpu_custom_call.1} parent=5 // pred_check_branch
        %150 = sbr.rel (%p148) target = $region16
      $region15: #{tpu_custom_call.1} parent=5 // pred_region
        // Predicated region
        $region17: #{tpu_custom_call.1} parent=15 // pred_check
          %p151 = pneg %p64
        $region18: #{tpu_custom_call.1} parent=15 // pred_check_branch
          %153 = sbr.rel (%p151) target = $region20
        $region19: #{tpu_custom_call.1} parent=15 // pred_region
          %s154 = sand.u32 %s54, 1
          %s155 = scalar_lea.sflag [#allocation5], %s154
          %s156 = sand.u32 %s54, 1
          %s157 = smul.addr %s156, 8
          %s158 = scalar_lea.vmem [#allocation4], %s157
          %p159 = scmp.lt.s32.totalorder %s34, 0
          %s160 = scalar_select %p159, %s34, 0
          %162 = vsyncadd %s155, 0
          %s163 = sadd.s32 %s160, %s33
          %s164 = smul.addr %s163, 8
          %s165 = scalar_lea.hbm %s1, %s164
          %s167 = sshll.u32 %s165, 4
          %s168 = int_to_ptr.hbm [resolvable:$true] %s167
          %s169 = sshll.u32 %s158, 4
          %s170 = int_to_ptr.vmem [resolvable:$true] %s169
          %172 = dma.hbm_to_vmem [thread:$0]  %s168, 128, %s170, %s155
        $region20: #{tpu_custom_call.1} parent=15 // pred_fallthru
          _
        // Predicated region
        $region21: #{tpu_custom_call.1} parent=15 // pred_check
          %p173 = pneg %p98
        $region22: #{tpu_custom_call.1} parent=15 // pred_check_branch
          %175 = sbr.rel (%p173) target = $region24
        $region23: #{tpu_custom_call.1} parent=15 // pred_region
          %s176 = sand.u32 %s88, 1
          %s177 = scalar_lea.sflag [#allocation8], %s176
          %s178 = sand.u32 %s88, 1
          %s179 = smul.addr %s178, 8
          %s180 = scalar_lea.vmem [#allocation7], %s179
          %s181 = ssub.s32 %s34, 1
          %p182 = scmp.gt.s32.totalorder %s181, 0
          %s183 = scalar_select %p182, %s181, 0
          %185 = vsyncadd %s177, 0
          %s186 = sadd.s32 %s183, %s33
          %s187 = smul.addr %s186, 8
          %s188 = scalar_lea.hbm %s2, %s187
          %s190 = sshll.u32 %s188, 4
          %s191 = int_to_ptr.hbm [resolvable:$true] %s190
          %s192 = sshll.u32 %s180, 4
          %s193 = int_to_ptr.vmem [resolvable:$true] %s192
          %195 = dma.hbm_to_vmem [thread:$0]  %s191, 128, %s193, %s177
        $region24: #{tpu_custom_call.1} parent=15 // pred_fallthru
          _
      $region16: #{tpu_custom_call.1} parent=5 // pred_fallthru
        _
      %p196 = scmp.le.s32.totalorder 1, %s26
      %p197 = scmp.lt.s32.totalorder %s26, 5
      %p198 = pnand %p196, %p197
      %p199 = pneg %p198
      // Predicated region
      $region25: #{tpu_custom_call.1} parent=5 // pred_check
        _
      $region26: #{tpu_custom_call.1} parent=5 // pred_check_branch
        %201 = sbr.rel (%p198) target = $region28
      $region27: #{tpu_custom_call.1} parent=5 // pred_region
        %s202 = ssub.s32 %s26, 1
        %s203 = sand.u32 %s57, 1
        %s204 = scalar_lea.sflag [#allocation5], %s203
        %s205 = sand.u32 %s57, 1
        %s206 = smul.addr %s205, 8
        %s207 = scalar_lea.vmem [#allocation4], %s206
        // Predicated region
        $region29: #{tpu_custom_call.1} parent=27 // pred_check
          %p208 = pneg %p70
        $region30: #{tpu_custom_call.1} parent=27 // pred_check_branch
          %210 = sbr.rel (%p208) target = $region32
        $region31: #{tpu_custom_call.1} parent=27 // pred_region
          %212 = dma.done %s204, 128
        $region32: #{tpu_custom_call.1} parent=27 // pred_fallthru
          _
        %s213 = sand.u32 %s91, 1
        %s214 = scalar_lea.sflag [#allocation8], %s213
        %s215 = sand.u32 %s91, 1
        %s216 = smul.addr %s215, 8
        %s217 = scalar_lea.vmem [#allocation7], %s216
        // Predicated region
        $region33: #{tpu_custom_call.1} parent=27 // pred_check
          %p218 = pneg %p104
        $region34: #{tpu_custom_call.1} parent=27 // pred_check_branch
          %220 = sbr.rel (%p218) target = $region36
        $region35: #{tpu_custom_call.1} parent=27 // pred_region
          %222 = dma.done %s214, 128
        $region36: #{tpu_custom_call.1} parent=27 // pred_fallthru
          _
        %s223 = sand.u32 %s57, 1
        %s224 = scalar_lea.sflag [#allocation5], %s223
        %s225 = sand.u32 %s57, 1
        %s226 = smul.addr %s225, 8
        %s227 = scalar_lea.vmem [#allocation4], %s226
        %p228 = pneg %p70
        %p229 = pneg %p67
        %s230 = sand.u32 %s91, 1
        %s231 = scalar_lea.sflag [#allocation8], %s230
        %s232 = sand.u32 %s91, 1
        %s233 = smul.addr %s232, 8
        %s234 = scalar_lea.vmem [#allocation7], %s233
        %p235 = pneg %p104
        %p236 = pneg %p101
        %p237 = pneg %p132
        %p238 = pneg %p129
        %s239 = sand.u32 %s119, 1
        %s240 = scalar_lea.sflag [#allocation6], %s239
        %s241 = sand.u32 %s119, 1
        %s242 = smul.addr %s241, 8
        %s243 = scalar_lea.vmem [#allocation9], %s242
        %p244 = scmp.lt.s32.totalorder %s36, 0
        %s245 = scalar_select %p244, %s36, 0
        %s246 = ssub.s32 %s36, 1
        %p247 = scmp.gt.s32.totalorder %s246, 0
        %s248 = scalar_select %p247, %s246, 0
        %s249 = sld [smem:[#allocation3]]
        %s250 = sld [smem:[#allocation3 + $0x1]]
        %p251 = scmp.lt.s32.totalorder %s36, 1
        // Predicated region
        $region37: #{tpu_custom_call.1} parent=27 // pred_check
          %p252 = pneg %p251
        $region38: #{tpu_custom_call.1} parent=27 // pred_check_branch
          %254 = sbr.rel (%p252) target = $region40
        $region39: #{tpu_custom_call.1} parent=27 // pred_region
          %v255 = vld [vmem:[%s207] sm:$0xff]
          %v256 = vstv %s250
          %v257 = vmul.f32 %v255, %v256
          %v258 = vround.ne.pseudo %v257
          %v259 = vmax.f32 %v258, -127.0
          %v260 = vmin.f32 %v259, 127.0
          %v261 = vstv %s249
          %v262 = vmul.f32 %v260, %v261
          %263 = vst [vmem:[%s243] sm:$0xff] %v262
        $region40: #{tpu_custom_call.1} parent=27 // pred_fallthru
          _
        %p264 = scmp.ge.s32.totalorder %s36, 1
        // Predicated region
        $region41: #{tpu_custom_call.1} parent=27 // pred_check
          %p265 = pneg %p264
        $region42: #{tpu_custom_call.1} parent=27 // pred_check_branch
          %267 = sbr.rel (%p265) target = $region44
        $region43: #{tpu_custom_call.1} parent=27 // pred_region
          %v268 = vld [vmem:[%s217] sm:$0xff]
          %v269 = vstv %s250
          %v270 = vmul.f32 %v268, %v269
          %v271 = vround.ne.pseudo %v270
          %v272 = vmax.f32 %v271, -127.0
          %v273 = vmin.f32 %v272, 127.0
          %v274 = vstv %s249
          %v275 = vmul.f32 %v273, %v274
          %276 = vst [vmem:[%s243] sm:$0xff] %v275
        $region44: #{tpu_custom_call.1} parent=27 // pred_fallthru
          _
        %s277 = sand.u32 %s119, 1
        %s278 = scalar_lea.sflag [#allocation6], %s277
        %s279 = sand.u32 %s119, 1
        %s280 = smul.addr %s279, 8
        %s281 = scalar_lea.vmem [#allocation9], %s280
        // Predicated region
        $region45: #{tpu_custom_call.1} parent=27 // pred_check
          %p282 = pneg %p129
        $region46: #{tpu_custom_call.1} parent=27 // pred_check_branch
          %284 = sbr.rel (%p282) target = $region48
        $region47: #{tpu_custom_call.1} parent=27 // pred_region
          %286 = vsyncadd %s278, 0
          %s287 = smul.addr %s35, 2
          %s288 = sadd.s32 %s36, %s287
          %s289 = smul.addr %s288, 8
          %s290 = scalar_lea.hbm %s3, %s289
          %s292 = sshll.u32 %s281, 4
          %s293 = int_to_ptr.vmem [resolvable:$true] %s292
          %s294 = sshll.u32 %s290, 4
          %s295 = int_to_ptr.hbm [resolvable:$true] %s294
          %297 = dma.vmem_to_hbm [thread:$0]  %s293, 128, %s295, %s278
        $region48: #{tpu_custom_call.1} parent=27 // pred_fallthru
          _
      $region28: #{tpu_custom_call.1} parent=5 // pred_fallthru
        _
      %p298 = scmp.le.s32.totalorder 2, %s26
      // Predicated region
      $region49: #{tpu_custom_call.1} parent=5 // pred_check
        %p299 = pneg %p298
      $region50: #{tpu_custom_call.1} parent=5 // pred_check_branch
        %301 = sbr.rel (%p299) target = $region52
      $region51: #{tpu_custom_call.1} parent=5 // pred_region
        %s302 = ssub.s32 %s26, 2
        // Predicated region
        $region53: #{tpu_custom_call.1} parent=51 // pred_check
          %p303 = pneg %p135
        $region54: #{tpu_custom_call.1} parent=51 // pred_check_branch
          %305 = sbr.rel (%p303) target = $region56
        $region55: #{tpu_custom_call.1} parent=51 // pred_region
          %s306 = sand.u32 %s120, 1
          %s307 = scalar_lea.sflag [#allocation6], %s306
          %s308 = sand.u32 %s120, 1
          %s309 = smul.addr %s308, 8
          %s310 = scalar_lea.vmem [#allocation9], %s309
          %312 = dma.done %s307, 128
        $region56: #{tpu_custom_call.1} parent=51 // pred_fallthru
          _
      $region52: #{tpu_custom_call.1} parent=5 // pred_fallthru
        _
    $region6: #{tpu_custom_call.1} parent=1 // loop_footer
      %s30 = sadd.s32 1, %s26
    $region7: #{tpu_custom_call.1} parent=1 // loop_footer_branch
      %25 = sbr.rel target = $region3
    $region8: #{tpu_custom_call.1} parent=1 // loop_exit
      _
    %313 = vsyncpa [#allocation5], 1
    %s314 = scalar_lea.sflag [#allocation5], 1
    %315 = vsyncpa %s314, 1
    %316 = vsyncpa [#allocation8], 1
    %s317 = scalar_lea.sflag [#allocation8], 1
    %318 = vsyncpa %s317, 1
    %319 = vsyncpa [#allocation6], 1
    %s320 = scalar_lea.sflag [#allocation6], 1
    %321 = vsyncpa %s320, 1

</llo_original>
